<compile_context>
chip_gen: v7x
topology: tpu7x:2x2x1
jax: 0.10.0
libtpu: 0.0.40
codegen_flags: <defaults>
</compile_context>

<pallas_src>
import functools

import numpy as np
import jax
import jax.numpy as jnp
from jax import lax
from jax.experimental import pallas as pl
from jax.experimental.pallas import tpu as pltpu


def _l2pool_kernel(x_ref, halo_ref, o_ref, sq_ref, colp_ref, *, toh, ow, w_in, h_in):
    """One (batch, channel-tile, output-row-tile) block, channels-last.

    x_ref   : (1, 2*toh, W, TC)      input rows 2*oh0 .. 2*oh0+2*toh-1 (tail may run past H)
    halo_ref: (1, 1,     W, TC)      input row 2*oh0-1 (clamped to 0 and zeroed for t == 0)
    o_ref   : (1, toh,   OW, TC)
    sq_ref  : (1, 2*toh+1, W+2, TC)  f32 squared inputs; col 0 and col W+1 are zero pads
    colp_ref: (1, 2*toh+1, OW,  TC)  f32 column-filtered squares ([1,2,1] taps, stride 2)
    """
    t = pl.program_id(2)
    f32 = jnp.float32
    tc = sq_ref.shape[-1]

    # ---- squared, zero-padded input rows -> sq scratch ------------------------------
    # sq row 0 = top halo (input row 2*oh0-1), sq rows 1..2*toh = the main block rows.
    zcols = jnp.zeros((1, 2 * toh + 1, 1, tc), f32)
    sq_ref[:, :, 0:1, :] = zcols                          # left zero-pad column
    sq_ref[:, :, w_in + 1:w_in + 2, :] = zcols            # right zero-pad column

    h = halo_ref[...].astype(f32)
    sq_ref[:, 0:1, 1:w_in + 1, :] = jnp.where(t > 0, h * h, 0.0)

    x = x_ref[...].astype(f32)
    sq_ref[:, 1:2 * toh + 1, 1:w_in + 1, :] = x * x

    if h_in % 2 == 1:
        # Odd H: the conv's bottom zero-pad row (input row h_in) lands inside the main
        # block of exactly one row tile; zero it there (other out-of-range rows only
        # feed output rows that Pallas drops).
        k = h_in + 1 - 2 * toh * t
        @pl.when(jnp.logical_and(k >= 1, k <= 2 * toh))
        def _():
            sq_ref[:, pl.ds(k, 1), :, :] = jnp.zeros((1, 1, w_in + 2, tc), f32)

    # ---- column pass: [1, 2, 1] taps, stride 2 along W (sublane dim) -----------------
    l = sq_ref[:, :, pl.ds(0, ow, 2), :]
    c = sq_ref[:, :, pl.ds(1, ow, 2), :]
    r = sq_ref[:, :, pl.ds(2, ow, 2), :]
    colp_ref[...] = (l + r) + 2.0 * c

    # ---- row pass: [1, 2, 1] taps, stride 2 along the (leading) row dim --------------
    top = colp_ref[:, pl.ds(0, toh, 2), :, :]
    mid = colp_ref[:, pl.ds(1, toh, 2), :, :]
    bot = colp_ref[:, pl.ds(2, toh, 2), :, :]
    acc = (top + bot) + 2.0 * mid

    # conv = acc / 16 ; out = sqrt(conv + 1e-12) = 0.25 * sqrt(acc + 16e-12)
    o_ref[...] = (0.25 * jnp.sqrt(acc + 16.0e-12)).astype(o_ref.dtype)


def _round_up(v, m):
    return -(-v // m) * m


def _vmem_bytes(toh, tc, w, ow, in_isz, out_isz):
    """Per-grid-step VMEM estimate: double-buffered blocks + both f32 scratches."""
    lane = _round_up(tc, 128)
    w8, ow8, wp8 = _round_up(w, 8), _round_up(ow, 8), _round_up(w + 2, 8)
    main = 2 * toh * w8 * lane * in_isz
    halo = w8 * lane * in_isz
    outb = toh * ow8 * lane * out_isz
    sq = (2 * toh + 1) * wp8 * lane * 4
    colp = (2 * toh + 1) * ow8 * lane * 4
    return 2 * (main + halo + outb) + sq + colp


def l2pooling_nhwc(x, *, filter_size=5, stride=2, pad_off=0,
                   vmem_budget_bytes=20 << 20, _force_toh=None):
    """L2pooling on an NHWC tensor (no wrapper-side layout or pad passes)."""
    assert filter_size == 5 and stride == 2 and pad_off == 0, "default config only"
    N, H, W, C = x.shape
    OH = (H - 1) // 2 + 1
    OW = (W - 1) // 2 + 1
    isz = np.dtype(x.dtype).itemsize

    # ---- channel tile: prefer full C; only split when C is a large multiple of 128.
    # TODO(synk): for C < 128 (e.g. the C=64 VGG stage in DISTS) pack two W columns into
    # the lane dim so vregs/stores are full-width; those layers currently run half-empty.
    cands = [c for c in range(C, 0, -1) if C % c == 0 and (c == C or c % 128 == 0)]
    TC = cands[-1]
    for c in cands:
        if _vmem_bytes(1, c, W, OW, isz, isz) <= vmem_budget_bytes:
            TC = c
            break

    # ---- row tile: largest TOH under the VMEM budget; OH need not be divisible.
    TOH = 1
    for cand in range(2, OH + 1):
        if _vmem_bytes(cand, TC, W, OW, isz, isz) <= vmem_budget_bytes:
            TOH = cand
        else:
            break
    if _force_toh is not None:
        TOH = max(1, min(int(_force_toh), OH))
    # Keep the 2*TOH-row input block within the array height (standard partial-tail
    # blocks only), then balance tile sizes across the cdiv grid.
    TOH = min(TOH, max(1, H // 2))
    T = -(-OH // TOH)
    TOH = -(-OH // T)

    est = _vmem_bytes(TOH, TC, W, OW, isz, isz)
    vmem_limit = int(max(32 << 20, est + (8 << 20)))

    kernel = functools.partial(_l2pool_kernel, toh=TOH, ow=OW, w_in=W, h_in=H)

    return pl.pallas_call(
        kernel,
        out_shape=jax.ShapeDtypeStruct((N, OH, OW, C), x.dtype),
        grid=(N, C // TC, T),
        in_specs=[
            # main block: input rows 2*TOH*t .. 2*TOH*t + 2*TOH - 1
            pl.BlockSpec((1, 2 * TOH, W, TC), lambda n, c, t: (n, t, 0, c)),
            # top halo: input row 2*TOH*t - 1 (row block size 1 => element index);
            # clamped to 0 for t == 0 and zeroed inside the kernel.
            pl.BlockSpec((1, 1, W, TC),
                         lambda n, c, t: (n, jnp.maximum(2 * TOH * t - 1, 0), 0, c)),
        ],
        out_specs=pl.BlockSpec((1, TOH, OW, TC), lambda n, c, t: (n, t, 0, c)),
        scratch_shapes=[
            pltpu.VMEM((1, 2 * TOH + 1, W + 2, TC), jnp.float32),  # squared, padded rows
            pltpu.VMEM((1, 2 * TOH + 1, OW, TC), jnp.float32),     # column-filtered rows
        ],
        compiler_params=pltpu.CompilerParams(
            dimension_semantics=("parallel", "parallel", "parallel"),
            vmem_limit_bytes=vmem_limit),
    )(x, x)


def l2pooling(x, **kwargs):
    """Module-compatible NCHW entry point (L2pooling.forward).

    The two transposes below are layout plumbing only; in a channels-last pipeline call
    l2pooling_nhwc directly and they disappear.
    """
    y = l2pooling_nhwc(jnp.transpose(x, (0, 2, 3, 1)), **kwargs)
    return jnp.transpose(y, (0, 3, 1, 2))


def _reference(x, filter_size=5, stride=2):
    """Pure-JAX reference mirroring F.conv2d(x**2, hanning, stride=2, pad=1, groups=C)."""
    N, C, H, W = x.shape
    pad = (filter_size - 2) // 2
    a = np.hanning(filter_size)[1:-1]
    g = a[:, None] * a[None, :]
    g = (g / g.sum()).astype(np.float32)
    filt = jnp.broadcast_to(jnp.asarray(g)[None, None], (C, 1, g.shape[0], g.shape[1]))
    out = lax.conv_general_dilated(
        x.astype(jnp.float32) ** 2, filt, window_strides=(stride, stride),
        padding=((pad, pad), (pad, pad)), feature_group_count=C,
        dimension_numbers=('NCHW', 'OIHW', 'NCHW'))
    return jnp.sqrt(out + 1e-12).astype(x.dtype)


if __name__ == "__main__":
    key = jax.random.PRNGKey(0)
    k1, k2, k3 = jax.random.split(key, 3)

    # 1) Small even shape (module-style NCHW in / NCHW out).
    x1 = jax.random.normal(k1, (2, 4, 16, 16), dtype=jnp.float32)
    out1 = jax.block_until_ready(l2pooling(x1))
    ref1 = _reference(x1)
    assert out1.shape == ref1.shape == (2, 4, 8, 8), out1.shape
    assert jnp.allclose(out1, ref1, atol=1e-5, rtol=1e-5), \
        float(jnp.max(jnp.abs(out1 - ref1)))

    # 2) Odd spatial dims (in-kernel zero padding on all edges, partial tail block).
    x2 = jax.random.normal(k2, (1, 3, 15, 17), dtype=jnp.float32)
    out2 = jax.block_until_ready(l2pooling(x2))
    ref2 = _reference(x2)
    assert out2.shape == ref2.shape, (out2.shape, ref2.shape)
    assert jnp.allclose(out2, ref2, atol=1e-5, rtol=1e-5), \
        float(jnp.max(jnp.abs(out2 - ref2)))

    # 3) Forced multi-row-tile path with a ragged tail: exercises the t>0 top-halo
    #    BlockSpec, the cdiv tail tile, and the odd-H bottom zero-pad row.
    x3 = jax.random.normal(k3, (1, 2, 13, 9), dtype=jnp.float32)
    out3 = jax.block_until_ready(l2pooling(x3, _force_toh=2))
    ref3 = _reference(x3)
    assert out3.shape == ref3.shape, (out3.shape, ref3.shape)
    assert jnp.allclose(out3, ref3, atol=1e-5, rtol=1e-5), \
        float(jnp.max(jnp.abs(out3 - ref3)))

    print("KERNEL_OK")
</pallas_src>

<mosaic_0001>
module attributes {stable_mosaic.version = 11 : i64} {
  func.func @_l2pool_kernel(%arg0: i32, %arg1: i32, %arg2: i32, %arg3: memref<1x16x16x4xf32, #tpu.memory_space<vmem>>, %arg4: memref<1x1x16x4xf32, #tpu.memory_space<vmem>>, %arg5: memref<1x8x8x4xf32, #tpu.memory_space<vmem>>, %arg6: memref<1x17x18x4xf32, #tpu.memory_space<vmem>>, %arg7: memref<1x17x8x4xf32, #tpu.memory_space<vmem>>) attributes {dimension_semantics = [#tpu.dimension_semantics<parallel>, #tpu.dimension_semantics<parallel>, #tpu.dimension_semantics<parallel>], iteration_bounds = array<i64: 2, 1, 1>, scalar_prefetch = 0 : i64, scratch_operands = 2 : i64, tpu.core_type = #tpu.core_type<tc>, window_params = [{transform_indices = @transform_0, window_bounds = array<i64: 1, 16, 16, 4>}, {transform_indices = @transform_1, window_bounds = array<i64: 1, 1, 16, 4>}, {transform_indices = @transform_2, window_bounds = array<i64: 1, 8, 8, 4>}]} {
    %cst = arith.constant 0.000000e+00 : f32
    %0 = vector.broadcast %cst : f32 to vector<1x17x1x4xf32>
    %c0 = arith.constant 0 : index
    %c0_0 = arith.constant 0 : index
    %c0_1 = arith.constant 0 : index
    %c0_2 = arith.constant 0 : index
    %1 = vector.load %arg6[%c0, %c0_0, %c0_1, %c0_2] : memref<1x17x18x4xf32, #tpu.memory_space<vmem>>, vector<1x17x1x4xf32>
    tpu.vector_store %arg6[%c0, %c0_0, %c0_1, %c0_2], %0 {strides = array<i32>} : memref<1x17x18x4xf32, #tpu.memory_space<vmem>>, vector<1x17x1x4xf32>,
    %c0_3 = arith.constant 0 : index
    %c0_4 = arith.constant 0 : index
    %c17 = arith.constant 17 : index
    %c0_5 = arith.constant 0 : index
    %2 = vector.load %arg6[%c0_3, %c0_4, %c17, %c0_5] : memref<1x17x18x4xf32, #tpu.memory_space<vmem>>, vector<1x17x1x4xf32>
    tpu.vector_store %arg6[%c0_3, %c0_4, %c17, %c0_5], %0 {strides = array<i32>} : memref<1x17x18x4xf32, #tpu.memory_space<vmem>>, vector<1x17x1x4xf32>,
    %c0_6 = arith.constant 0 : index
    %c0_7 = arith.constant 0 : index
    %c0_8 = arith.constant 0 : index
    %c0_9 = arith.constant 0 : index
    %3 = vector.load %arg4[%c0_6, %c0_7, %c0_8, %c0_9] : memref<1x1x16x4xf32, #tpu.memory_space<vmem>>, vector<1x1x16x4xf32>
    %c0_i32 = arith.constant 0 : i32
    %4 = arith.cmpi sgt, %arg2, %c0_i32 : i32
    %5 = arith.mulf %3, %3 : vector<1x1x16x4xf32>
    %cst_10 = arith.constant 0.000000e+00 : f32
    %6 = vector.broadcast %cst_10 : f32 to vector<1x1x16x4xf32>
    %7 = arith.select %4, %5, %6 : vector<1x1x16x4xf32>
    %c0_11 = arith.constant 0 : index
    %c0_12 = arith.constant 0 : index
    %c1 = arith.constant 1 : index
    %c0_13 = arith.constant 0 : index
    %8 = vector.load %arg6[%c0_11, %c0_12, %c1, %c0_13] : memref<1x17x18x4xf32, #tpu.memory_space<vmem>>, vector<1x1x16x4xf32>
    tpu.vector_store %arg6[%c0_11, %c0_12, %c1, %c0_13], %7 {strides = array<i32>} : memref<1x17x18x4xf32, #tpu.memory_space<vmem>>, vector<1x1x16x4xf32>,
    %c0_14 = arith.constant 0 : index
    %c0_15 = arith.constant 0 : index
    %c0_16 = arith.constant 0 : index
    %c0_17 = arith.constant 0 : index
    %9 = vector.load %arg3[%c0_14, %c0_15, %c0_16, %c0_17] : memref<1x16x16x4xf32, #tpu.memory_space<vmem>>, vector<1x16x16x4xf32>
    %10 = arith.mulf %9, %9 : vector<1x16x16x4xf32>
    %c0_18 = arith.constant 0 : index
    %c1_19 = arith.constant 1 : index
    %c1_20 = arith.constant 1 : index
    %c0_21 = arith.constant 0 : index
    %11 = vector.load %arg6[%c0_18, %c1_19, %c1_20, %c0_21] : memref<1x17x18x4xf32, #tpu.memory_space<vmem>>, vector<1x16x16x4xf32>
    tpu.vector_store %arg6[%c0_18, %c1_19, %c1_20, %c0_21], %10 {strides = array<i32>} : memref<1x17x18x4xf32, #tpu.memory_space<vmem>>, vector<1x16x16x4xf32>,
    %c0_22 = arith.constant 0 : index
    %c0_23 = arith.constant 0 : index
    %c0_24 = arith.constant 0 : index
    %c0_25 = arith.constant 0 : index
    %12 = tpu.strided_load %arg6[%c0_22, %c0_23, %c0_24, %c0_25] {strides = array<i32: 1, 1, 2, 1>} : memref<1x17x18x4xf32, #tpu.memory_space<vmem>>, vector<1x17x8x4xf32>
    %c0_26 = arith.constant 0 : index
    %c0_27 = arith.constant 0 : index
    %c1_28 = arith.constant 1 : index
    %c0_29 = arith.constant 0 : index
    %13 = tpu.strided_load %arg6[%c0_26, %c0_27, %c1_28, %c0_29] {strides = array<i32: 1, 1, 2, 1>} : memref<1x17x18x4xf32, #tpu.memory_space<vmem>>, vector<1x17x8x4xf32>
    %c0_30 = arith.constant 0 : index
    %c0_31 = arith.constant 0 : index
    %c2 = arith.constant 2 : index
    %c0_32 = arith.constant 0 : index
    %14 = tpu.strided_load %arg6[%c0_30, %c0_31, %c2, %c0_32] {strides = array<i32: 1, 1, 2, 1>} : memref<1x17x18x4xf32, #tpu.memory_space<vmem>>, vector<1x17x8x4xf32>
    %15 = arith.addf %12, %14 : vector<1x17x8x4xf32>
    %cst_33 = arith.constant 2.000000e+00 : f32
    %16 = vector.broadcast %cst_33 : f32 to vector<1x17x8x4xf32>
    %17 = arith.mulf %16, %13 : vector<1x17x8x4xf32>
    %18 = arith.addf %15, %17 : vector<1x17x8x4xf32>
    %c0_34 = arith.constant 0 : index
    %c0_35 = arith.constant 0 : index
    %c0_36 = arith.constant 0 : index
    %c0_37 = arith.constant 0 : index
    %19 = vector.load %arg7[%c0_34, %c0_35, %c0_36, %c0_37] : memref<1x17x8x4xf32, #tpu.memory_space<vmem>>, vector<1x17x8x4xf32>
    tpu.vector_store %arg7[%c0_34, %c0_35, %c0_36, %c0_37], %18 {strides = array<i32>} : memref<1x17x8x4xf32, #tpu.memory_space<vmem>>, vector<1x17x8x4xf32>,
    %c0_38 = arith.constant 0 : index
    %c0_39 = arith.constant 0 : index
    %c0_40 = arith.constant 0 : index
    %c0_41 = arith.constant 0 : index
    %20 = tpu.strided_load %arg7[%c0_38, %c0_39, %c0_40, %c0_41] {strides = array<i32: 1, 2, 1, 1>} : memref<1x17x8x4xf32, #tpu.memory_space<vmem>>, vector<1x8x8x4xf32>
    %c0_42 = arith.constant 0 : index
    %c1_43 = arith.constant 1 : index
    %c0_44 = arith.constant 0 : index
    %c0_45 = arith.constant 0 : index
    %21 = tpu.strided_load %arg7[%c0_42, %c1_43, %c0_44, %c0_45] {strides = array<i32: 1, 2, 1, 1>} : memref<1x17x8x4xf32, #tpu.memory_space<vmem>>, vector<1x8x8x4xf32>
    %c0_46 = arith.constant 0 : index
    %c2_47 = arith.constant 2 : index
    %c0_48 = arith.constant 0 : index
    %c0_49 = arith.constant 0 : index
    %22 = tpu.strided_load %arg7[%c0_46, %c2_47, %c0_48, %c0_49] {strides = array<i32: 1, 2, 1, 1>} : memref<1x17x8x4xf32, #tpu.memory_space<vmem>>, vector<1x8x8x4xf32>
    %23 = arith.addf %20, %22 : vector<1x8x8x4xf32>
    %cst_50 = arith.constant 2.000000e+00 : f32
    %24 = vector.broadcast %cst_50 : f32 to vector<1x8x8x4xf32>
    %25 = arith.mulf %24, %21 : vector<1x8x8x4xf32>
    %26 = arith.addf %23, %25 : vector<1x8x8x4xf32>
    %cst_51 = arith.constant 1.600000e-11 : f32
    %27 = vector.broadcast %cst_51 : f32 to vector<1x8x8x4xf32>
    %28 = arith.addf %26, %27 : vector<1x8x8x4xf32>
    %29 = math.sqrt %28 : vector<1x8x8x4xf32>
    %cst_52 = arith.constant 2.500000e-01 : f32
    %30 = vector.broadcast %cst_52 : f32 to vector<1x8x8x4xf32>
    %31 = arith.mulf %30, %29 : vector<1x8x8x4xf32>
    %c0_53 = arith.constant 0 : index
    %c0_54 = arith.constant 0 : index
    %c0_55 = arith.constant 0 : index
    %c0_56 = arith.constant 0 : index
    %32 = vector.load %arg5[%c0_53, %c0_54, %c0_55, %c0_56] : memref<1x8x8x4xf32, #tpu.memory_space<vmem>>, vector<1x8x8x4xf32>
    tpu.vector_store %arg5[%c0_53, %c0_54, %c0_55, %c0_56], %31 {strides = array<i32>} : memref<1x8x8x4xf32, #tpu.memory_space<vmem>>, vector<1x8x8x4xf32>,
    return
  }
  func.func @transform_0(%arg0: i32, %arg1: i32, %arg2: i32) -> (i32, i32, i32, i32) {
    %c0_i32 = arith.constant 0 : i32
    %c0_i32_0 = arith.constant 0 : i32
    return %arg0, %arg2, %c0_i32, %arg1 : i32, i32, i32, i32
  }
  func.func @transform_1(%arg0: i32, %arg1: i32, %arg2: i32) -> (i32, i32, i32, i32) {
    %c16_i32 = arith.constant 16 : i32
    %0 = arith.muli %c16_i32, %arg2 : i32
    %c1_i32 = arith.constant 1 : i32
    %1 = arith.subi %0, %c1_i32 : i32
    %c0_i32 = arith.constant 0 : i32
    %2 = arith.maxsi %1, %c0_i32 : i32
    %c0_i32_0 = arith.constant 0 : i32
    %c0_i32_1 = arith.constant 0 : i32
    return %arg0, %2, %c0_i32_0, %arg1 : i32, i32, i32, i32
  }
  func.func @transform_2(%arg0: i32, %arg1: i32, %arg2: i32) -> (i32, i32, i32, i32) {
    %c0_i32 = arith.constant 0 : i32
    %c0_i32_0 = arith.constant 0 : i32
    return %arg0, %arg2, %c0_i32, %arg1 : i32, i32, i32, i32
  }
}

</mosaic_0001>

<llo_original>
// kernel: tpu_custom_call.1
$region0: #{tpu_custom_call.1}
  #allocation0 [shape = 'u32[]', space=smem, size = 0x4, offset = 0x4, fixed_abs, tag = 'smem constant byte address 0x4 - core index']
  #allocation1 [shape = 'u32[144,128]{1,0:T(1,128)}', space=vmem, size = 0x12000, scoped, tag = 'internal scratch']
  #allocation2 [shape = 'f32[1,17,18,4]{3,2,1,0:T(8,128)}', space=vmem, size = 0x33000, scoped, tag = 'scratch operand']
  #allocation3 [shape = 'f32[1,17,8,4]{3,2,1,0:T(8,128)}', space=vmem, size = 0x11000, scoped, tag = 'scratch operand']
  %s0 = inlined_call_operand.vmem [shape: f32[2,16,16,4], index: 0, kind: input, shape index: {}]
  %s1 = inlined_call_operand.vmem [shape: f32[2,16,16,4], index: 1, kind: input, shape index: {}]
  %s2 = inlined_call_operand.vmem [shape: f32[2,8,8,4], index: 2, kind: output, shape index: {}]
  %s3 = sld [smem:[#allocation0]]
  $region41: #{tpu_custom_call.1} parent=0
    _
  %s5 = ssub.s32 1, %s3
  %s6 = scalar_select 0, %s5, %s3
  loop: start=0, step=1, limit=4
  $region2: #{tpu_custom_call.1} parent=0 // loop_pre_header
    _
  $region3: #{tpu_custom_call.1} parent=0 // loop_header
    %s8 = sphi 0, %s12
    %p9 = scmp.ge.s32.totalorder %s8, 4
    %s15 = sphi 0, %s34
    %s16 = sphi 0, %s30
    %s17 = sphi 0, %s26
    %s18 = sphi 0, %s15
    %s19 = sphi 0, %s16
    %s20 = sphi 0, %s17
    %s21 = sphi 0, %s18
    %s22 = sphi 0, %s19
    %s23 = sphi 0, %s20
    %s41 = sphi 0, %s43
    %s44 = sphi 0, %s41
    %s45 = sphi 0, %s44
    %s61 = sphi 0, %s45
    %s79 = sphi 0, %s81
    %s82 = sphi 0, %s79
    %s83 = sphi 0, %s82
    %s99 = sphi 0, %s83
    %s109 = sphi 0, %s111
    %s112 = sphi 0, %s109
    %s113 = sphi 0, %s112
    %s129 = sphi 0, %s113
  $region4: #{tpu_custom_call.1} parent=0 // loop_header_branch
    %11 = sbr.rel (%p9) target = $region8
  $region5: #{tpu_custom_call.1} parent=0 // loop_body
    %s13 = ssub.s32 %s8, 1
    %s14 = ssub.s32 %s8, 2
    %s24 = sadd.s32 1, %s17
    %p25 = scmp.ge.s32.totalorder %s24, 1
    %s26 = scalar_select %p25, 0, %s24
    %s27 = sadd.s32 1, %s16
    %s28 = scalar_select %p25, %s27, %s16
    %p29 = scmp.ge.s32.totalorder %s28, 1
    %s30 = scalar_select %p29, 0, %s28
    %s31 = sadd.s32 1, %s15
    %s32 = scalar_select %p29, %s31, %s15
    %p33 = scmp.ge.s32.totalorder %s32, 2
    %s34 = scalar_select %p33, 0, %s32
    %s35 = ssub.s32 %s15, %s34
    %s36 = ssub.s32 %s17, %s26
    %s37 = sor.u32 %s35, %s36
    %s38 = ssub.s32 %s16, %s30
    %s39 = sor.u32 %s37, %s38
    %p40 = scmp.eq.s32.totalorder %s39, 0
    %s42 = sadd.s32 %s41, 1
    %s43 = scalar_select %p40, %s41, %s42
    %p46 = pneg %p40
    %p47 = scmp.eq.s32.totalorder %s8, 1
    %p48 = por %p46, %p47
    %p49 = scmp.ne.s32.totalorder %s41, %s44
    %p50 = scmp.eq.s32.totalorder %s8, 0
    %p51 = por %p49, %p50
    %p52 = scmp.ne.s32.totalorder %s41, %s44
    %p53 = scmp.eq.s32.totalorder %s13, 1
    %p54 = por %p52, %p53
    %p55 = scmp.ne.s32.totalorder %s44, %s45
    %p56 = scmp.eq.s32.totalorder %s13, 0
    %p57 = por %p55, %p56
    %p58 = scmp.ne.s32.totalorder %s44, %s45
    %p59 = scmp.eq.s32.totalorder %s14, 1
    %p60 = por %p58, %p59
    %p62 = scmp.ne.s32.totalorder %s45, %s61
    %p63 = scmp.eq.s32.totalorder %s14, 0
    %p64 = por %p62, %p63
    %s65 = smul.u32 %s17, 16
    %s66 = ssub.s32 %s65, 1
    %p67 = scmp.gt.s32.totalorder %s66, 0
    %s68 = scalar_select %p67, %s66, 0
    %s69 = smul.u32 %s26, 16
    %s70 = ssub.s32 %s69, 1
    %p71 = scmp.gt.s32.totalorder %s70, 0
    %s72 = scalar_select %p71, %s70, 0
    %s73 = ssub.s32 %s15, %s34
    %s74 = ssub.s32 %s68, %s72
    %s75 = sor.u32 %s73, %s74
    %s76 = ssub.s32 %s16, %s30
    %s77 = sor.u32 %s75, %s76
    %p78 = scmp.eq.s32.totalorder %s77, 0
    %s80 = sadd.s32 %s79, 1
    %s81 = scalar_select %p78, %s79, %s80
    %p84 = pneg %p78
    %p85 = scmp.eq.s32.totalorder %s8, 1
    %p86 = por %p84, %p85
    %p87 = scmp.ne.s32.totalorder %s79, %s82
    %p88 = scmp.eq.s32.totalorder %s8, 0
    %p89 = por %p87, %p88
    %p90 = scmp.ne.s32.totalorder %s79, %s82
    %p91 = scmp.eq.s32.totalorder %s13, 1
    %p92 = por %p90, %p91
    %p93 = scmp.ne.s32.totalorder %s82, %s83
    %p94 = scmp.eq.s32.totalorder %s13, 0
    %p95 = por %p93, %p94
    %p96 = scmp.ne.s32.totalorder %s82, %s83
    %p97 = scmp.eq.s32.totalorder %s14, 1
    %p98 = por %p96, %p97
    %p100 = scmp.ne.s32.totalorder %s83, %s99
    %p101 = scmp.eq.s32.totalorder %s14, 0
    %p102 = por %p100, %p101
    %s103 = ssub.s32 %s15, %s34
    %s104 = ssub.s32 %s17, %s26
    %s105 = sor.u32 %s103, %s104
    %s106 = ssub.s32 %s16, %s30
    %s107 = sor.u32 %s105, %s106
    %p108 = scmp.eq.s32.totalorder %s107, 0
    %s110 = sadd.s32 %s109, 1
    %s111 = scalar_select %p108, %s109, %s110
    %p114 = pneg %p108
    %p115 = scmp.eq.s32.totalorder %s8, 1
    %p116 = por %p114, %p115
    %p117 = scmp.ne.s32.totalorder %s109, %s112
    %p118 = scmp.eq.s32.totalorder %s8, 0
    %p119 = por %p117, %p118
    %p120 = scmp.ne.s32.totalorder %s109, %s112
    %p121 = scmp.eq.s32.totalorder %s13, 1
    %p122 = por %p120, %p121
    %p123 = scmp.ne.s32.totalorder %s112, %s113
    %p124 = scmp.eq.s32.totalorder %s13, 0
    %p125 = por %p123, %p124
    %p126 = scmp.ne.s32.totalorder %s112, %s113
    %p127 = scmp.eq.s32.totalorder %s14, 1
    %p128 = por %p126, %p127
    %p130 = scmp.ne.s32.totalorder %s113, %s129
    %p131 = scmp.eq.s32.totalorder %s14, 0
    %p132 = por %p130, %p131
    %p133 = scmp.le.s32.totalorder 1, %s8
    %p134 = scmp.lt.s32.totalorder %s8, 3
    %p135 = pnand %p133, %p134
    %p136 = pneg %p135
    // Predicated region
    $region9: #{tpu_custom_call.1} parent=5 // pred_check
      _
    $region10: #{tpu_custom_call.1} parent=5 // pred_check_branch
      %138 = sbr.rel (%p135) target = $region12
    $region11: #{tpu_custom_call.1} parent=5 // pred_region
      %s139 = ssub.s32 %s8, 1
    $region12: #{tpu_custom_call.1} parent=5 // pred_fallthru
      _
    %p140 = scmp.lt.s32.totalorder %s8, 2
    // Predicated region
    $region13: #{tpu_custom_call.1} parent=5 // pred_check
      %p141 = pneg %p140
    $region14: #{tpu_custom_call.1} parent=5 // pred_check_branch
      %143 = sbr.rel (%p141) target = $region16
    $region15: #{tpu_custom_call.1} parent=5 // pred_region
      // Predicated region
      $region17: #{tpu_custom_call.1} parent=15 // pred_check
        %p144 = pneg %p51
      $region18: #{tpu_custom_call.1} parent=15 // pred_check_branch
        %146 = sbr.rel (%p144) target = $region20
      $region19: #{tpu_custom_call.1} parent=15 // pred_region
        %s147 = smul.u32 16, %s17
        %p148 = scmp.lt.s32.totalorder %s15, 1
        %s149 = scalar_select %p148, %s15, 1
        %p150 = scmp.lt.s32.totalorder %s147, 15
        %s151 = scalar_select %p150, %s147, 15
        %p152 = scmp.lt.s32.totalorder %s16, 0
        %s153 = scalar_select %p152, %s16, 0
        %s154 = smul.addr %s151, 2
        %s155 = sadd.s32 %s153, %s154
        %s156 = smul.addr %s149, 32
        %s157 = sadd.s32 %s155, %s156
        %s158 = smul.addr %s157, 8
        %s159 = scalar_lea.vmem %s0, %s158
        %s160 = smul.u32 16, %s17
      $region20: #{tpu_custom_call.1} parent=15 // pred_fallthru
        _
      // Predicated region
      $region21: #{tpu_custom_call.1} parent=15 // pred_check
        %p161 = pneg %p89
      $region22: #{tpu_custom_call.1} parent=15 // pred_check_branch
        %163 = sbr.rel (%p161) target = $region24
      $region23: #{tpu_custom_call.1} parent=15 // pred_region
        %s164 = smul.u32 %s17, 16
        %s165 = ssub.s32 %s164, 1
        %p166 = scmp.gt.s32.totalorder %s165, 0
        %s167 = scalar_select %p166, %s165, 0
        %p168 = scmp.lt.s32.totalorder %s15, 1
        %s169 = scalar_select %p168, %s15, 1
        %p170 = scmp.lt.s32.totalorder %s167, 15
        %s171 = scalar_select %p170, %s167, 15
        %p172 = scmp.lt.s32.totalorder %s16, 0
        %s173 = scalar_select %p172, %s16, 0
        %s174 = smul.addr %s171, 2
        %s175 = sadd.s32 %s173, %s174
        %s176 = smul.addr %s169, 32
        %s177 = sadd.s32 %s175, %s176
        %s178 = smul.addr %s177, 8
        %s179 = scalar_lea.vmem %s1, %s178
        %s180 = smul.u32 %s17, 16
        %s181 = ssub.s32 %s180, 1
        %p182 = scmp.gt.s32.totalorder %s181, 0
        %s183 = scalar_select %p182, %s181, 0
      $region24: #{tpu_custom_call.1} parent=15 // pred_fallthru
        _
    $region16: #{tpu_custom_call.1} parent=5 // pred_fallthru
      _
    %p184 = scmp.le.s32.totalorder 1, %s8
    %p185 = scmp.lt.s32.totalorder %s8, 3
    %p186 = pnand %p184, %p185
    %p187 = pneg %p186
    // Predicated region
    $region25: #{tpu_custom_call.1} parent=5 // pred_check
      _
    $region26: #{tpu_custom_call.1} parent=5 // pred_check_branch
      %189 = sbr.rel (%p186) target = $region28
    $region27: #{tpu_custom_call.1} parent=5 // pred_region
      %s190 = ssub.s32 %s8, 1
      %s191 = smul.u32 16, %s20
      %p192 = scmp.lt.s32.totalorder %s18, 1
      %s193 = scalar_select %p192, %s18, 1
      %p194 = scmp.lt.s32.totalorder %s191, 15
      %s195 = scalar_select %p194, %s191, 15
      %p196 = scmp.lt.s32.totalorder %s19, 0
      %s197 = scalar_select %p196, %s19, 0
      %s198 = smul.addr %s195, 2
      %s199 = sadd.s32 %s197, %s198
      %s200 = smul.addr %s193, 32
      %s201 = sadd.s32 %s199, %s200
      %s202 = smul.addr %s201, 8
      %s203 = scalar_lea.vmem %s0, %s202
      %p204 = pneg %p57
      %p205 = pneg %p54
      %s206 = smul.u32 %s20, 16
      %s207 = ssub.s32 %s206, 1
      %p208 = scmp.gt.s32.totalorder %s207, 0
      %s209 = scalar_select %p208, %s207, 0
      %p210 = scmp.lt.s32.totalorder %s18, 1
      %s211 = scalar_select %p210, %s18, 1
      %p212 = scmp.lt.s32.totalorder %s209, 15
      %s213 = scalar_select %p212, %s209, 15
      %p214 = scmp.lt.s32.totalorder %s19, 0
      %s215 = scalar_select %p214, %s19, 0
      %s216 = smul.addr %s213, 2
      %s217 = sadd.s32 %s215, %s216
      %s218 = smul.addr %s211, 32
      %s219 = sadd.s32 %s217, %s218
      %s220 = smul.addr %s219, 8
      %s221 = scalar_lea.vmem %s1, %s220
      %p222 = pneg %p95
      %p223 = pneg %p92
      %p224 = pneg %p125
      %p225 = pneg %p122
      %s226 = smul.u32 8, %s20
      %p227 = scmp.lt.s32.totalorder %s18, 1
      %s228 = scalar_select %p227, %s18, 1
      %p229 = scmp.lt.s32.totalorder %s226, 7
      %s230 = scalar_select %p229, %s226, 7
      %p231 = scmp.lt.s32.totalorder %s19, 0
      %s232 = scalar_select %p231, %s19, 0
      %s233 = sadd.s32 %s232, %s230
      %s234 = smul.addr %s228, 8
      %s235 = sadd.s32 %s233, %s234
      %s236 = smul.addr %s235, 8
      %s237 = scalar_lea.vmem %s2, %s236
      %s238 = smul.u32 16, %s20
      %p239 = scmp.lt.s32.totalorder %s18, 1
      %s240 = scalar_select %p239, %s18, 1
      %p241 = scmp.lt.s32.totalorder %s238, 15
      %s242 = scalar_select %p241, %s238, 15
      %p243 = scmp.lt.s32.totalorder %s19, 0
      %s244 = scalar_select %p243, %s19, 0
      %s245 = smul.addr %s242, 2
      %s246 = sadd.s32 %s244, %s245
      %s247 = smul.addr %s240, 32
      %s248 = sadd.s32 %s246, %s247
      %s249 = smul.addr %s248, 8
      %s250 = scalar_lea.vmem %s0, %s249
      %s251 = smul.u32 16, %s20
      %s252 = smul.u32 %s20, 16
      %s253 = ssub.s32 %s252, 1
      %p254 = scmp.gt.s32.totalorder %s253, 0
      %s255 = scalar_select %p254, %s253, 0
      %p256 = scmp.lt.s32.totalorder %s18, 1
      %s257 = scalar_select %p256, %s18, 1
      %p258 = scmp.lt.s32.totalorder %s255, 15
      %s259 = scalar_select %p258, %s255, 15
      %p260 = scmp.lt.s32.totalorder %s19, 0
      %s261 = scalar_select %p260, %s19, 0
      %s262 = smul.addr %s259, 2
      %s263 = sadd.s32 %s261, %s262
      %s264 = smul.addr %s257, 32
      %s265 = sadd.s32 %s263, %s264
      %s266 = smul.addr %s265, 8
      %s267 = scalar_lea.vmem %s1, %s266
      %s268 = smul.u32 %s20, 16
      %s269 = ssub.s32 %s268, 1
      %p270 = scmp.gt.s32.totalorder %s269, 0
      %s271 = scalar_select %p270, %s269, 0
      %s272 = smul.u32 8, %s20
      %p273 = scmp.lt.s32.totalorder %s18, 1
      %s274 = scalar_select %p273, %s18, 1
      %p275 = scmp.lt.s32.totalorder %s272, 7
      %s276 = scalar_select %p275, %s272, 7
      %p277 = scmp.lt.s32.totalorder %s19, 0
      %s278 = scalar_select %p277, %s19, 0
      %s279 = sadd.s32 %s278, %s276
      %s280 = smul.addr %s274, 8
      %s281 = sadd.s32 %s279, %s280
      %s282 = smul.addr %s281, 8
      %s283 = scalar_lea.vmem %s2, %s282
      %s284 = smul.u32 8, %s20
      %vm285 = vcmask 24576
      %286 = vst.msk [vmem:[#allocation2] sm:$0x1] %vm285, 0.0
      %287 = vst.msk [vmem:[#allocation2 + $0x18] sm:$0x1] %vm285, 0.0
      %288 = vst.msk [vmem:[#allocation2 + $0x30] sm:$0x1] %vm285, 0.0
      %289 = vst.msk [vmem:[#allocation2 + $0x48] sm:$0x1] %vm285, 0.0
      %290 = vst.msk [vmem:[#allocation2 + $0x60] sm:$0x1] %vm285, 0.0
      %291 = vst.msk [vmem:[#allocation2 + $0x78] sm:$0x1] %vm285, 0.0
      %292 = vst.msk [vmem:[#allocation2 + $0x90] sm:$0x1] %vm285, 0.0
      %293 = vst.msk [vmem:[#allocation2 + $0xa8] sm:$0x1] %vm285, 0.0
      %294 = vst.msk [vmem:[#allocation2 + $0xc0] sm:$0x1] %vm285, 0.0
      %295 = vst.msk [vmem:[#allocation2 + $0xd8] sm:$0x1] %vm285, 0.0
      %296 = vst.msk [vmem:[#allocation2 + $0xf0] sm:$0x1] %vm285, 0.0
      %297 = vst.msk [vmem:[#allocation2 + $0x108] sm:$0x1] %vm285, 0.0
      %298 = vst.msk [vmem:[#allocation2 + $0x120] sm:$0x1] %vm285, 0.0
      %299 = vst.msk [vmem:[#allocation2 + $0x138] sm:$0x1] %vm285, 0.0
      %300 = vst.msk [vmem:[#allocation2 + $0x150] sm:$0x1] %vm285, 0.0
      %301 = vst.msk [vmem:[#allocation2 + $0x168] sm:$0x1] %vm285, 0.0
      %302 = vst.msk [vmem:[#allocation2 + $0x180] sm:$0x1] %vm285, 0.0
      %303 = vst.msk [vmem:[#allocation2 + $0x11] sm:$0x1] %vm285, 0.0
      %304 = vst.msk [vmem:[#allocation2 + $0x29] sm:$0x1] %vm285, 0.0
      %305 = vst.msk [vmem:[#allocation2 + $0x41] sm:$0x1] %vm285, 0.0
      %306 = vst.msk [vmem:[#allocation2 + $0x59] sm:$0x1] %vm285, 0.0
      %307 = vst.msk [vmem:[#allocation2 + $0x71] sm:$0x1] %vm285, 0.0
      %308 = vst.msk [vmem:[#allocation2 + $0x89] sm:$0x1] %vm285, 0.0
      %309 = vst.msk [vmem:[#allocation2 + $0xa1] sm:$0x1] %vm285, 0.0
      %310 = vst.msk [vmem:[#allocation2 + $0xb9] sm:$0x1] %vm285, 0.0
      %311 = vst.msk [vmem:[#allocation2 + $0xd1] sm:$0x1] %vm285, 0.0
      %312 = vst.msk [vmem:[#allocation2 + $0xe9] sm:$0x1] %vm285, 0.0
      %313 = vst.msk [vmem:[#allocation2 + $0x101] sm:$0x1] %vm285, 0.0
      %314 = vst.msk [vmem:[#allocation2 + $0x119] sm:$0x1] %vm285, 0.0
      %315 = vst.msk [vmem:[#allocation2 + $0x131] sm:$0x1] %vm285, 0.0
      %316 = vst.msk [vmem:[#allocation2 + $0x149] sm:$0x1] %vm285, 0.0
      %317 = vst.msk [vmem:[#allocation2 + $0x161] sm:$0x1] %vm285, 0.0
      %318 = vst.msk [vmem:[#allocation2 + $0x179] sm:$0x1] %vm285, 0.0
      %319 = vst.msk [vmem:[#allocation2 + $0x191] sm:$0x1] %vm285, 0.0
      %v320 = vld [vmem:[%s267] sm:$0xff]
      %v321 = vld [vmem:[%s267 + $0x8] sm:$0xff]
      %p322 = scmp.gt.s32.totalorder %s20, 0
      %v323 = vmul.f32 %v320, %v320
      %v324 = vmul.f32 %v321, %v321
      %s325 = scalar_select %p322, 1, 0
      %v326 = vstv %s325
      %vm327 = vcmp.eq.s32.totalorder %v326, 1
      %v328 = vsel %vm327, %v323, 0.0
      %v329 = vsel %vm327, %v324, 0.0
      %vm330 = vcmask 31744
      %331 = vst.msk [vmem:[#allocation2 + $0x1] sm:$0xff] %vm330, %v328
      %332 = vst.msk [vmem:[#allocation2 + $0x9] sm:$0xff] %vm330, %v329
      %v333 = vld [vmem:[%s250] sm:$0xff]
      %v334 = vld [vmem:[%s250 + $0x8] sm:$0xff]
      %v335 = vld [vmem:[%s250 + $0x10] sm:$0xff]
      %v336 = vld [vmem:[%s250 + $0x18] sm:$0xff]
      %v337 = vld [vmem:[%s250 + $0x20] sm:$0xff]
      %v338 = vld [vmem:[%s250 + $0x28] sm:$0xff]
      %v339 = vld [vmem:[%s250 + $0x30] sm:$0xff]
      %v340 = vld [vmem:[%s250 + $0x38] sm:$0xff]
      %v341 = vld [vmem:[%s250 + $0x40] sm:$0xff]
      %v342 = vld [vmem:[%s250 + $0x48] sm:$0xff]
      %v343 = vld [vmem:[%s250 + $0x50] sm:$0xff]
      %v344 = vld [vmem:[%s250 + $0x58] sm:$0xff]
      %v345 = vld [vmem:[%s250 + $0x60] sm:$0xff]
      %v346 = vld [vmem:[%s250 + $0x68] sm:$0xff]
      %v347 = vld [vmem:[%s250 + $0x70] sm:$0xff]
      %v348 = vld [vmem:[%s250 + $0x78] sm:$0xff]
      %v349 = vld [vmem:[%s250 + $0x80] sm:$0xff]
      %v350 = vld [vmem:[%s250 + $0x88] sm:$0xff]
      %v351 = vld [vmem:[%s250 + $0x90] sm:$0xff]
      %v352 = vld [vmem:[%s250 + $0x98] sm:$0xff]
      %v353 = vld [vmem:[%s250 + $0xa0] sm:$0xff]
      %v354 = vld [vmem:[%s250 + $0xa8] sm:$0xff]
      %v355 = vld [vmem:[%s250 + $0xb0] sm:$0xff]
      %v356 = vld [vmem:[%s250 + $0xb8] sm:$0xff]
      %v357 = vld [vmem:[%s250 + $0xc0] sm:$0xff]
      %v358 = vld [vmem:[%s250 + $0xc8] sm:$0xff]
      %v359 = vld [vmem:[%s250 + $0xd0] sm:$0xff]
      %v360 = vld [vmem:[%s250 + $0xd8] sm:$0xff]
      %v361 = vld [vmem:[%s250 + $0xe0] sm:$0xff]
      %v362 = vld [vmem:[%s250 + $0xe8] sm:$0xff]
      %v363 = vld [vmem:[%s250 + $0xf0] sm:$0xff]
      %v364 = vld [vmem:[%s250 + $0xf8] sm:$0xff]
      %v365 = vmul.f32 %v333, %v333
      %v366 = vmul.f32 %v334, %v334
      %v367 = vmul.f32 %v335, %v335
      %v368 = vmul.f32 %v336, %v336
      %v369 = vmul.f32 %v337, %v337
      %v370 = vmul.f32 %v338, %v338
      %v371 = vmul.f32 %v339, %v339
      %v372 = vmul.f32 %v340, %v340
      %v373 = vmul.f32 %v341, %v341
      %v374 = vmul.f32 %v342, %v342
      %v375 = vmul.f32 %v343, %v343
      %v376 = vmul.f32 %v344, %v344
      %v377 = vmul.f32 %v345, %v345
      %v378 = vmul.f32 %v346, %v346
      %v379 = vmul.f32 %v347, %v347
      %v380 = vmul.f32 %v348, %v348
      %v381 = vmul.f32 %v349, %v349
      %v382 = vmul.f32 %v350, %v350
      %v383 = vmul.f32 %v351, %v351
      %v384 = vmul.f32 %v352, %v352
      %v385 = vmul.f32 %v353, %v353
      %v386 = vmul.f32 %v354, %v354
      %v387 = vmul.f32 %v355, %v355
      %v388 = vmul.f32 %v356, %v356
      %v389 = vmul.f32 %v357, %v357
      %v390 = vmul.f32 %v358, %v358
      %v391 = vmul.f32 %v359, %v359
      %v392 = vmul.f32 %v360, %v360
      %v393 = vmul.f32 %v361, %v361
      %v394 = vmul.f32 %v362, %v362
      %v395 = vmul.f32 %v363, %v363
      %v396 = vmul.f32 %v364, %v364
      %s397 = scalar_lea.vmem [#allocation2], 24
      %398 = vst.msk [vmem:[%s397 + $0x1] sm:$0xff] %vm330, %v365
      %399 = vst.msk [vmem:[%s397 + $0x9] sm:$0xff] %vm330, %v366
      %400 = vst.msk [vmem:[%s397 + $0x19] sm:$0xff] %vm330, %v367
      %401 = vst.msk [vmem:[%s397 + $0x21] sm:$0xff] %vm330, %v368
      %402 = vst.msk [vmem:[%s397 + $0x31] sm:$0xff] %vm330, %v369
      %403 = vst.msk [vmem:[%s397 + $0x39] sm:$0xff] %vm330, %v370
      %404 = vst.msk [vmem:[%s397 + $0x49] sm:$0xff] %vm330, %v371
      %405 = vst.msk [vmem:[%s397 + $0x51] sm:$0xff] %vm330, %v372
      %406 = vst.msk [vmem:[%s397 + $0x61] sm:$0xff] %vm330, %v373
      %407 = vst.msk [vmem:[%s397 + $0x69] sm:$0xff] %vm330, %v374
      %408 = vst.msk [vmem:[%s397 + $0x79] sm:$0xff] %vm330, %v375
      %409 = vst.msk [vmem:[%s397 + $0x81] sm:$0xff] %vm330, %v376
      %410 = vst.msk [vmem:[%s397 + $0x91] sm:$0xff] %vm330, %v377
      %411 = vst.msk [vmem:[%s397 + $0x99] sm:$0xff] %vm330, %v378
      %412 = vst.msk [vmem:[%s397 + $0xa9] sm:$0xff] %vm330, %v379
      %413 = vst.msk [vmem:[%s397 + $0xb1] sm:$0xff] %vm330, %v380
      %414 = vst.msk [vmem:[%s397 + $0xc1] sm:$0xff] %vm330, %v381
      %415 = vst.msk [vmem:[%s397 + $0xc9] sm:$0xff] %vm330, %v382
      %416 = vst.msk [vmem:[%s397 + $0xd9] sm:$0xff] %vm330, %v383
      %417 = vst.msk [vmem:[%s397 + $0xe1] sm:$0xff] %vm330, %v384
      %418 = vst.msk [vmem:[%s397 + $0xf1] sm:$0xff] %vm330, %v385
      %419 = vst.msk [vmem:[%s397 + $0xf9] sm:$0xff] %vm330, %v386
      %420 = vst.msk [vmem:[%s397 + $0x109] sm:$0xff] %vm330, %v387
      %421 = vst.msk [vmem:[%s397 + $0x111] sm:$0xff] %vm330, %v388
      %422 = vst.msk [vmem:[%s397 + $0x121] sm:$0xff] %vm330, %v389
      %423 = vst.msk [vmem:[%s397 + $0x129] sm:$0xff] %vm330, %v390
      %424 = vst.msk [vmem:[%s397 + $0x139] sm:$0xff] %vm330, %v391
      %425 = vst.msk [vmem:[%s397 + $0x141] sm:$0xff] %vm330, %v392
      %426 = vst.msk [vmem:[%s397 + $0x151] sm:$0xff] %vm330, %v393
      %427 = vst.msk [vmem:[%s397 + $0x159] sm:$0xff] %vm330, %v394
      %428 = vst.msk [vmem:[%s397 + $0x169] sm:$0xff] %vm330, %v395
      %429 = vst.msk [vmem:[%s397 + $0x171] sm:$0xff] %vm330, %v396
      %v430 = vld [vmem:[#allocation2] ss:$2 sm:$0xff]
      %s431 = scalar_lea.vmem [#allocation2], 24
      %v432 = vld [vmem:[%s431] ss:$2 sm:$0xff]
      %s433 = scalar_lea.vmem [#allocation2], 48
      %v434 = vld [vmem:[%s433] ss:$2 sm:$0xff]
      %s435 = scalar_lea.vmem [#allocation2], 72
      %v436 = vld [vmem:[%s435] ss:$2 sm:$0xff]
      %s437 = scalar_lea.vmem [#allocation2], 96
      %v438 = vld [vmem:[%s437] ss:$2 sm:$0xff]
      %s439 = scalar_lea.vmem [#allocation2], 120
      %v440 = vld [vmem:[%s439] ss:$2 sm:$0xff]
      %s441 = scalar_lea.vmem [#allocation2], 144
      %v442 = vld [vmem:[%s441] ss:$2 sm:$0xff]
      %s443 = scalar_lea.vmem [#allocation2], 168
      %v444 = vld [vmem:[%s443] ss:$2 sm:$0xff]
      %s445 = scalar_lea.vmem [#allocation2], 192
      %v446 = vld [vmem:[%s445] ss:$2 sm:$0xff]
      %s447 = scalar_lea.vmem [#allocation2], 216
      %v448 = vld [vmem:[%s447] ss:$2 sm:$0xff]
      %s449 = scalar_lea.vmem [#allocation2], 240
      %v450 = vld [vmem:[%s449] ss:$2 sm:$0xff]
      %s451 = scalar_lea.vmem [#allocation2], 264
      %v452 = vld [vmem:[%s451] ss:$2 sm:$0xff]
      %s453 = scalar_lea.vmem [#allocation2], 288
      %v454 = vld [vmem:[%s453] ss:$2 sm:$0xff]
      %s455 = scalar_lea.vmem [#allocation2], 312
      %v456 = vld [vmem:[%s455] ss:$2 sm:$0xff]
      %s457 = scalar_lea.vmem [#allocation2], 336
      %v458 = vld [vmem:[%s457] ss:$2 sm:$0xff]
      %s459 = scalar_lea.vmem [#allocation2], 360
      %v460 = vld [vmem:[%s459] ss:$2 sm:$0xff]
      %s461 = scalar_lea.vmem [#allocation2], 384
      %v462 = vld [vmem:[%s461] ss:$2 sm:$0xff]
      %s463 = scalar_lea.vmem [#allocation2], 1
      %v464 = vld [vmem:[%s463] ss:$2 sm:$0xff]
      %s465 = scalar_lea.vmem [#allocation2], 25
      %v466 = vld [vmem:[%s465] ss:$2 sm:$0xff]
      %s467 = scalar_lea.vmem [#allocation2], 49
      %v468 = vld [vmem:[%s467] ss:$2 sm:$0xff]
      %s469 = scalar_lea.vmem [#allocation2], 73
      %v470 = vld [vmem:[%s469] ss:$2 sm:$0xff]
      %s471 = scalar_lea.vmem [#allocation2], 97
      %v472 = vld [vmem:[%s471] ss:$2 sm:$0xff]
      %s473 = scalar_lea.vmem [#allocation2], 121
      %v474 = vld [vmem:[%s473] ss:$2 sm:$0xff]
      %s475 = scalar_lea.vmem [#allocation2], 145
      %v476 = vld [vmem:[%s475] ss:$2 sm:$0xff]
      %s477 = scalar_lea.vmem [#allocation2], 169
      %v478 = vld [vmem:[%s477] ss:$2 sm:$0xff]
      %s479 = scalar_lea.vmem [#allocation2], 193
      %v480 = vld [vmem:[%s479] ss:$2 sm:$0xff]
      %s481 = scalar_lea.vmem [#allocation2], 217
      %v482 = vld [vmem:[%s481] ss:$2 sm:$0xff]
      %s483 = scalar_lea.vmem [#allocation2], 241
      %v484 = vld [vmem:[%s483] ss:$2 sm:$0xff]
      %s485 = scalar_lea.vmem [#allocation2], 265
      %v486 = vld [vmem:[%s485] ss:$2 sm:$0xff]
      %s487 = scalar_lea.vmem [#allocation2], 289
      %v488 = vld [vmem:[%s487] ss:$2 sm:$0xff]
      %s489 = scalar_lea.vmem [#allocation2], 313
      %v490 = vld [vmem:[%s489] ss:$2 sm:$0xff]
      %s491 = scalar_lea.vmem [#allocation2], 337
      %v492 = vld [vmem:[%s491] ss:$2 sm:$0xff]
      %s493 = scalar_lea.vmem [#allocation2], 361
      %v494 = vld [vmem:[%s493] ss:$2 sm:$0xff]
      %s495 = scalar_lea.vmem [#allocation2], 385
      %v496 = vld [vmem:[%s495] ss:$2 sm:$0xff]
      %s497 = scalar_lea.vmem [#allocation2], 2
      %v498 = vld [vmem:[%s497] ss:$2 sm:$0xff]
      %s499 = scalar_lea.vmem [#allocation2], 26
      %v500 = vld [vmem:[%s499] ss:$2 sm:$0xff]
      %s501 = scalar_lea.vmem [#allocation2], 50
      %v502 = vld [vmem:[%s501] ss:$2 sm:$0xff]
      %s503 = scalar_lea.vmem [#allocation2], 74
      %v504 = vld [vmem:[%s503] ss:$2 sm:$0xff]
      %s505 = scalar_lea.vmem [#allocation2], 98
      %v506 = vld [vmem:[%s505] ss:$2 sm:$0xff]
      %s507 = scalar_lea.vmem [#allocation2], 122
      %v508 = vld [vmem:[%s507] ss:$2 sm:$0xff]
      %s509 = scalar_lea.vmem [#allocation2], 146
      %v510 = vld [vmem:[%s509] ss:$2 sm:$0xff]
      %s511 = scalar_lea.vmem [#allocation2], 170
      %v512 = vld [vmem:[%s511] ss:$2 sm:$0xff]
      %s513 = scalar_lea.vmem [#allocation2], 194
      %v514 = vld [vmem:[%s513] ss:$2 sm:$0xff]
      %s515 = scalar_lea.vmem [#allocation2], 218
      %v516 = vld [vmem:[%s515] ss:$2 sm:$0xff]
      %s517 = scalar_lea.vmem [#allocation2], 242
      %v518 = vld [vmem:[%s517] ss:$2 sm:$0xff]
      %s519 = scalar_lea.vmem [#allocation2], 266
      %v520 = vld [vmem:[%s519] ss:$2 sm:$0xff]
      %s521 = scalar_lea.vmem [#allocation2], 290
      %v522 = vld [vmem:[%s521] ss:$2 sm:$0xff]
      %s523 = scalar_lea.vmem [#allocation2], 314
      %v524 = vld [vmem:[%s523] ss:$2 sm:$0xff]
      %s525 = scalar_lea.vmem [#allocation2], 338
      %v526 = vld [vmem:[%s525] ss:$2 sm:$0xff]
      %s527 = scalar_lea.vmem [#allocation2], 362
      %v528 = vld [vmem:[%s527] ss:$2 sm:$0xff]
      %s529 = scalar_lea.vmem [#allocation2], 386
      %v530 = vld [vmem:[%s529] ss:$2 sm:$0xff]
      %v531 = vadd.f32 %v430, %v498
      %v532 = vadd.f32 %v432, %v500
      %v533 = vadd.f32 %v434, %v502
      %v534 = vadd.f32 %v436, %v504
      %v535 = vadd.f32 %v438, %v506
      %v536 = vadd.f32 %v440, %v508
      %v537 = vadd.f32 %v442, %v510
      %v538 = vadd.f32 %v444, %v512
      %v539 = vadd.f32 %v446, %v514
      %v540 = vadd.f32 %v448, %v516
      %v541 = vadd.f32 %v450, %v518
      %v542 = vadd.f32 %v452, %v520
      %v543 = vadd.f32 %v454, %v522
      %v544 = vadd.f32 %v456, %v524
      %v545 = vadd.f32 %v458, %v526
      %v546 = vadd.f32 %v460, %v528
      %v547 = vadd.f32 %v462, %v530
      %v548 = vmul.f32 %v464, 2.0
      %v549 = vmul.f32 %v466, 2.0
      %v550 = vmul.f32 %v468, 2.0
      %v551 = vmul.f32 %v470, 2.0
      %v552 = vmul.f32 %v472, 2.0
      %v553 = vmul.f32 %v474, 2.0
      %v554 = vmul.f32 %v476, 2.0
      %v555 = vmul.f32 %v478, 2.0
      %v556 = vmul.f32 %v480, 2.0
      %v557 = vmul.f32 %v482, 2.0
      %v558 = vmul.f32 %v484, 2.0
      %v559 = vmul.f32 %v486, 2.0
      %v560 = vmul.f32 %v488, 2.0
      %v561 = vmul.f32 %v490, 2.0
      %v562 = vmul.f32 %v492, 2.0
      %v563 = vmul.f32 %v494, 2.0
      %v564 = vmul.f32 %v496, 2.0
      %v565 = vadd.f32 %v531, %v548
      %v566 = vadd.f32 %v532, %v549
      %v567 = vadd.f32 %v533, %v550
      %v568 = vadd.f32 %v534, %v551
      %v569 = vadd.f32 %v535, %v552
      %v570 = vadd.f32 %v536, %v553
      %v571 = vadd.f32 %v537, %v554
      %v572 = vadd.f32 %v538, %v555
      %v573 = vadd.f32 %v539, %v556
      %v574 = vadd.f32 %v540, %v557
      %v575 = vadd.f32 %v541, %v558
      %v576 = vadd.f32 %v542, %v559
      %v577 = vadd.f32 %v543, %v560
      %v578 = vadd.f32 %v544, %v561
      %v579 = vadd.f32 %v545, %v562
      %v580 = vadd.f32 %v546, %v563
      %v581 = vadd.f32 %v547, %v564
      %582 = vst.msk [vmem:[#allocation3] sm:$0xff] %vm330, %v565
      %583 = vst.msk [vmem:[#allocation3 + $0x8] sm:$0xff] %vm330, %v566
      %584 = vst.msk [vmem:[#allocation3 + $0x10] sm:$0xff] %vm330, %v567
      %585 = vst.msk [vmem:[#allocation3 + $0x18] sm:$0xff] %vm330, %v568
      %586 = vst.msk [vmem:[#allocation3 + $0x20] sm:$0xff] %vm330, %v569
      %587 = vst.msk [vmem:[#allocation3 + $0x28] sm:$0xff] %vm330, %v570
      %588 = vst.msk [vmem:[#allocation3 + $0x30] sm:$0xff] %vm330, %v571
      %589 = vst.msk [vmem:[#allocation3 + $0x38] sm:$0xff] %vm330, %v572
      %590 = vst.msk [vmem:[#allocation3 + $0x40] sm:$0xff] %vm330, %v573
      %591 = vst.msk [vmem:[#allocation3 + $0x48] sm:$0xff] %vm330, %v574
      %592 = vst.msk [vmem:[#allocation3 + $0x50] sm:$0xff] %vm330, %v575
      %593 = vst.msk [vmem:[#allocation3 + $0x58] sm:$0xff] %vm330, %v576
      %594 = vst.msk [vmem:[#allocation3 + $0x60] sm:$0xff] %vm330, %v577
      %595 = vst.msk [vmem:[#allocation3 + $0x68] sm:$0xff] %vm330, %v578
      %596 = vst.msk [vmem:[#allocation3 + $0x70] sm:$0xff] %vm330, %v579
      %597 = vst.msk [vmem:[#allocation3 + $0x78] sm:$0xff] %vm330, %v580
      %598 = vst.msk [vmem:[#allocation3 + $0x80] sm:$0xff] %vm330, %v581
      %v599 = vld [vmem:[#allocation3] sm:$0xff]
      %v600 = vld [vmem:[#allocation3 + $0x10] sm:$0xff]
      %v601 = vld [vmem:[#allocation3 + $0x20] sm:$0xff]
      %v602 = vld [vmem:[#allocation3 + $0x30] sm:$0xff]
      %v603 = vld [vmem:[#allocation3 + $0x40] sm:$0xff]
      %v604 = vld [vmem:[#allocation3 + $0x50] sm:$0xff]
      %v605 = vld [vmem:[#allocation3 + $0x60] sm:$0xff]
      %v606 = vld [vmem:[#allocation3 + $0x70] sm:$0xff]
      %s607 = scalar_lea.vmem [#allocation3], 8
      %v608 = vld [vmem:[%s607] sm:$0xff]
      %v609 = vld [vmem:[%s607 + $0x10] sm:$0xff]
      %v610 = vld [vmem:[%s607 + $0x20] sm:$0xff]
      %v611 = vld [vmem:[%s607 + $0x30] sm:$0xff]
      %v612 = vld [vmem:[%s607 + $0x40] sm:$0xff]
      %v613 = vld [vmem:[%s607 + $0x50] sm:$0xff]
      %v614 = vld [vmem:[%s607 + $0x60] sm:$0xff]
      %v615 = vld [vmem:[%s607 + $0x70] sm:$0xff]
      %s616 = scalar_lea.vmem [#allocation3], 16
      %v617 = vld [vmem:[%s616] sm:$0xff]
      %v618 = vld [vmem:[%s616 + $0x10] sm:$0xff]
      %v619 = vld [vmem:[%s616 + $0x20] sm:$0xff]
      %v620 = vld [vmem:[%s616 + $0x30] sm:$0xff]
      %v621 = vld [vmem:[%s616 + $0x40] sm:$0xff]
      %v622 = vld [vmem:[%s616 + $0x50] sm:$0xff]
      %v623 = vld [vmem:[%s616 + $0x60] sm:$0xff]
      %v624 = vld [vmem:[%s616 + $0x70] sm:$0xff]
      %v625 = vadd.f32 %v599, %v617
      %v626 = vadd.f32 %v600, %v618
      %v627 = vadd.f32 %v601, %v619
      %v628 = vadd.f32 %v602, %v620
      %v629 = vadd.f32 %v603, %v621
      %v630 = vadd.f32 %v604, %v622
      %v631 = vadd.f32 %v605, %v623
      %v632 = vadd.f32 %v606, %v624
      %v633 = vmul.f32 %v608, 2.0
      %v634 = vmul.f32 %v609, 2.0
      %v635 = vmul.f32 %v610, 2.0
      %v636 = vmul.f32 %v611, 2.0
      %v637 = vmul.f32 %v612, 2.0
      %v638 = vmul.f32 %v613, 2.0
      %v639 = vmul.f32 %v614, 2.0
      %v640 = vmul.f32 %v615, 2.0
      %v641 = vadd.f32 %v625, %v633
      %v642 = vadd.f32 %v626, %v634
      %v643 = vadd.f32 %v627, %v635
      %v644 = vadd.f32 %v628, %v636
      %v645 = vadd.f32 %v629, %v637
      %v646 = vadd.f32 %v630, %v638
      %v647 = vadd.f32 %v631, %v639
      %v648 = vadd.f32 %v632, %v640
      %v649 = vadd.f32 %v641, 1.6e-11
      %v650 = vadd.f32 %v642, 1.6e-11
      %v651 = vadd.f32 %v643, 1.6e-11
      %v652 = vadd.f32 %v644, 1.6e-11
      %v653 = vadd.f32 %v645, 1.6e-11
      %v654 = vadd.f32 %v646, 1.6e-11
      %v655 = vadd.f32 %v647, 1.6e-11
      %v656 = vadd.f32 %v648, 1.6e-11
      %v657 = vrsqrt.pop %v649
      %v658 = vmul.f32 %v649, %v657
      %vm659 = vcmp.eq.f32.partialorder %v649, inf
      %v660 = vsel %vm659, %v649, %v658
      %vm661 = vcmp.eq.f32.partialorder %v649, 0.0
      %v662 = vand.u32 %v649, 2147483648
      %v663 = vsel %vm661, %v662, %v660
      %v664 = vrsqrt.pop %v650
      %v665 = vmul.f32 %v650, %v664
      %vm666 = vcmp.eq.f32.partialorder %v650, inf
      %v667 = vsel %vm666, %v650, %v665
      %vm668 = vcmp.eq.f32.partialorder %v650, 0.0
      %v669 = vand.u32 %v650, 2147483648
      %v670 = vsel %vm668, %v669, %v667
      %v671 = vrsqrt.pop %v651
      %v672 = vmul.f32 %v651, %v671
      %vm673 = vcmp.eq.f32.partialorder %v651, inf
      %v674 = vsel %vm673, %v651, %v672
      %vm675 = vcmp.eq.f32.partialorder %v651, 0.0
      %v676 = vand.u32 %v651, 2147483648
      %v677 = vsel %vm675, %v676, %v674
      %v678 = vrsqrt.pop %v652
      %v679 = vmul.f32 %v652, %v678
      %vm680 = vcmp.eq.f32.partialorder %v652, inf
      %v681 = vsel %vm680, %v652, %v679
      %vm682 = vcmp.eq.f32.partialorder %v652, 0.0
      %v683 = vand.u32 %v652, 2147483648
      %v684 = vsel %vm682, %v683, %v681
      %v685 = vrsqrt.pop %v653
      %v686 = vmul.f32 %v653, %v685
      %vm687 = vcmp.eq.f32.partialorder %v653, inf
      %v688 = vsel %vm687, %v653, %v686
      %vm689 = vcmp.eq.f32.partialorder %v653, 0.0
      %v690 = vand.u32 %v653, 2147483648
      %v691 = vsel %vm689, %v690, %v688
      %v692 = vrsqrt.pop %v654
      %v693 = vmul.f32 %v654, %v692
      %vm694 = vcmp.eq.f32.partialorder %v654, inf
      %v695 = vsel %vm694, %v654, %v693
      %vm696 = vcmp.eq.f32.partialorder %v654, 0.0
      %v697 = vand.u32 %v654, 2147483648
      %v698 = vsel %vm696, %v697, %v695
      %v699 = vrsqrt.pop %v655
      %v700 = vmul.f32 %v655, %v699
      %vm701 = vcmp.eq.f32.partialorder %v655, inf
      %v702 = vsel %vm701, %v655, %v700
      %vm703 = vcmp.eq.f32.partialorder %v655, 0.0
      %v704 = vand.u32 %v655, 2147483648
      %v705 = vsel %vm703, %v704, %v702
      %v706 = vrsqrt.pop %v656
      %v707 = vmul.f32 %v656, %v706
      %vm708 = vcmp.eq.f32.partialorder %v656, inf
      %v709 = vsel %vm708, %v656, %v707
      %vm710 = vcmp.eq.f32.partialorder %v656, 0.0
      %v711 = vand.u32 %v656, 2147483648
      %v712 = vsel %vm710, %v711, %v709
      %v713 = vmul.f32 %v663, 0.25
      %v714 = vmul.f32 %v670, 0.25
      %v715 = vmul.f32 %v677, 0.25
      %v716 = vmul.f32 %v684, 0.25
      %v717 = vmul.f32 %v691, 0.25
      %v718 = vmul.f32 %v698, 0.25
      %v719 = vmul.f32 %v705, 0.25
      %v720 = vmul.f32 %v712, 0.25
      %721 = vst.msk [vmem:[%s283] sm:$0xff] %vm330, %v713
      %722 = vst.msk [vmem:[%s283 + $0x8] sm:$0xff] %vm330, %v714
      %723 = vst.msk [vmem:[%s283 + $0x10] sm:$0xff] %vm330, %v715
      %724 = vst.msk [vmem:[%s283 + $0x18] sm:$0xff] %vm330, %v716
      %725 = vst.msk [vmem:[%s283 + $0x20] sm:$0xff] %vm330, %v717
      %726 = vst.msk [vmem:[%s283 + $0x28] sm:$0xff] %vm330, %v718
      %727 = vst.msk [vmem:[%s283 + $0x30] sm:$0xff] %vm330, %v719
      %728 = vst.msk [vmem:[%s283 + $0x38] sm:$0xff] %vm330, %v720
      %s729 = smul.u32 8, %s20
      %p730 = scmp.lt.s32.totalorder %s18, 1
      %s731 = scalar_select %p730, %s18, 1
      %p732 = scmp.lt.s32.totalorder %s729, 7
      %s733 = scalar_select %p732, %s729, 7
      %p734 = scmp.lt.s32.totalorder %s19, 0
      %s735 = scalar_select %p734, %s19, 0
      %s736 = sadd.s32 %s735, %s733
      %s737 = smul.addr %s731, 8
      %s738 = sadd.s32 %s736, %s737
      %s739 = smul.addr %s738, 8
      %s740 = scalar_lea.vmem %s2, %s739
      // Predicated region
      $region29: #{tpu_custom_call.1} parent=27 // pred_check
        %p741 = pneg %p122
      $region30: #{tpu_custom_call.1} parent=27 // pred_check_branch
        %743 = sbr.rel (%p741) target = $region32
      $region31: #{tpu_custom_call.1} parent=27 // pred_region
        %s744 = smul.u32 8, %s20
      $region32: #{tpu_custom_call.1} parent=27 // pred_fallthru
        _
    $region28: #{tpu_custom_call.1} parent=5 // pred_fallthru
      _
    %p745 = scmp.le.s32.totalorder 2, %s8
    // Predicated region
    $region33: #{tpu_custom_call.1} parent=5 // pred_check
      %p746 = pneg %p745
    $region34: #{tpu_custom_call.1} parent=5 // pred_check_branch
      %748 = sbr.rel (%p746) target = $region36
    $region35: #{tpu_custom_call.1} parent=5 // pred_region
      %s749 = ssub.s32 %s8, 2
      // Predicated region
      $region37: #{tpu_custom_call.1} parent=35 // pred_check
        %p750 = pneg %p128
      $region38: #{tpu_custom_call.1} parent=35 // pred_check_branch
        %752 = sbr.rel (%p750) target = $region40
      $region39: #{tpu_custom_call.1} parent=35 // pred_region
        %s753 = smul.u32 8, %s23
        %p754 = scmp.lt.s32.totalorder %s21, 1
        %s755 = scalar_select %p754, %s21, 1
        %p756 = scmp.lt.s32.totalorder %s753, 7
        %s757 = scalar_select %p756, %s753, 7
        %p758 = scmp.lt.s32.totalorder %s22, 0
        %s759 = scalar_select %p758, %s22, 0
        %s760 = sadd.s32 %s759, %s757
        %s761 = smul.addr %s755, 8
        %s762 = sadd.s32 %s760, %s761
        %s763 = smul.addr %s762, 8
        %s764 = scalar_lea.vmem %s2, %s763
      $region40: #{tpu_custom_call.1} parent=35 // pred_fallthru
        _
    $region36: #{tpu_custom_call.1} parent=5 // pred_fallthru
      _
  $region6: #{tpu_custom_call.1} parent=0 // loop_footer
    %s12 = sadd.s32 1, %s8
  $region7: #{tpu_custom_call.1} parent=0 // loop_footer_branch
    %7 = sbr.rel target = $region3
  $region8: #{tpu_custom_call.1} parent=0 // loop_exit
    _

</llo_original>
